<compile_context>
chip_gen: v6e
topology: v6e:2x2x1
jax: 0.10.0
libtpu: 0.0.40
codegen_flags: <defaults>
</compile_context>

<pallas_src>
import functools

import jax
import jax.numpy as jnp
from jax.experimental import pallas as pl
from jax.experimental.pallas import tpu as pltpu


def _round_up(n, m):
    return (n + m - 1) // m * m


def _plearn_fused_kernel(x_ref, w1_ref, b1_ref, w2_ref, o_ref):
    """One grid step = one batch tile.

    x_ref  : (TM, D)  input tile
    w1_ref : (D, N)   fused first-layer weights (active components, transposed,
                      lane-padded; constant block -> resident across tiles)
    b1_ref : (1, N)   fused first-layer bias (incl. the b2-carrier unit)
    w2_ref : (1, N)   fused second-layer weights (incl. sum of active b2)
    o_ref  : (TM, 1)  sigmoid output tile
    """
    # First layer: a single wide MXU matmul over the fused hidden axis.
    h = jnp.dot(x_ref[...], w1_ref[...], preferred_element_type=jnp.float32)
    h = jnp.maximum(h + b1_ref[...], 0.0)
    # Second layer: VPU multiply + lane reduce instead of an N=1 MXU matmul.
    # The carrier lane contributes relu(1) * sum(active b2) = sum(active b2);
    # padded lanes contribute relu(0) * 0 = 0.
    y = jnp.sum(h * w2_ref[...], axis=-1, keepdims=True)
    o_ref[...] = jax.nn.sigmoid(y).astype(o_ref.dtype)


@functools.partial(jax.jit, static_argnames=("active",))
def plearn1hsg_forward(x, w1, b1, w2, b2, active):
    """Forward pass of PLearn1HSG.

    x: (B, D); w1: (C, H, D); b1: (C, H); w2: (C, H); b2: (C,)
    active: static tuple of C python bools (mirrors the module's python flags).
    """
    B, D = x.shape
    C, H, _ = w1.shape
    active = tuple(bool(a) for a in active)
    assert len(active) == C and any(active), "need >= 1 active component"
    act_idx = tuple(i for i, a in enumerate(active) if a)
    Ca = len(act_idx)

    compute_dtype = x.dtype  # bf16 callers keep bf16 MXU operands; f32 accumulate.

    # ---- static packing of the ACTIVE components into one fused hidden axis --
    idx = jnp.asarray(act_idx, jnp.int32)
    w1_act = jnp.take(w1, idx, axis=0)             # (Ca, H, D)
    b1_act = jnp.take(b1, idx, axis=0)             # (Ca, H)
    w2_act = jnp.take(w2, idx, axis=0)             # (Ca, H)
    b2_tot = jnp.sum(jnp.take(b2, idx, axis=0))    # scalar

    n_raw = Ca * H + 1                      # +1 lane carries the summed b2
    N = _round_up(n_raw, 128)               # lane-align the fused axis

    # W1 fused & pre-transposed: column (k*H + h) is W1_k[h, :].
    w1_all = jnp.zeros((D, N), compute_dtype)
    w1_all = w1_all.at[:, : Ca * H].set(
        jnp.transpose(w1_act, (2, 0, 1)).reshape(D, Ca * H).astype(compute_dtype)
    )

    b1_all = jnp.zeros((1, N), jnp.float32)
    b1_all = b1_all.at[0, : Ca * H].set(b1_act.reshape(-1).astype(jnp.float32))
    b1_all = b1_all.at[0, Ca * H].set(1.0)                    # carrier: relu(1) = 1

    w2_all = jnp.zeros((1, N), jnp.float32)
    w2_all = w2_all.at[0, : Ca * H].set(w2_act.reshape(-1).astype(jnp.float32))
    w2_all = w2_all.at[0, Ca * H].set(b2_tot.astype(jnp.float32))  # 1 * sum(b2)

    # ---- batch tiling: rows padded to a multiple of 8, tile capped at 512 ----
    b_pad8 = _round_up(B, 8)
    TM = b_pad8 if b_pad8 <= 512 else 512
    B_pad = _round_up(B, TM)
    x_p = x.astype(compute_dtype)
    if B_pad != B:
        x_p = jnp.pad(x_p, ((0, B_pad - B), (0, 0)))

    out = pl.pallas_call(
        _plearn_fused_kernel,
        out_shape=jax.ShapeDtypeStruct((B_pad, 1), jnp.float32),
        grid_spec=pltpu.PrefetchScalarGridSpec(
            num_scalar_prefetch=0,
            grid=(B_pad // TM,),
            in_specs=[
                pl.BlockSpec((TM, D), lambda b: (b, 0)),   # x batch tile
                pl.BlockSpec((D, N), lambda b: (0, 0)),    # fused W1 (resident)
                pl.BlockSpec((1, N), lambda b: (0, 0)),    # fused b1 (+carrier)
                pl.BlockSpec((1, N), lambda b: (0, 0)),    # fused w2 (+sum b2)
            ],
            out_specs=pl.BlockSpec((TM, 1), lambda b: (b, 0)),
        ),
        compiler_params=pltpu.CompilerParams(
            dimension_semantics=("parallel",),   # batch tiles shard across cores
        ),
    )(x_p, w1_all, b1_all, w2_all)

    return out[:B]


# ----------------------------- test harness ---------------------------------


def _torch_linear_init(key, out_features, in_features):
    """Deterministic emulation of nn.Linear default init: U(-1/sqrt(in), 1/sqrt(in))."""
    kw, kb = jax.random.split(key)
    bound = 1.0 / jnp.sqrt(jnp.float32(in_features))
    w = jax.random.uniform(kw, (out_features, in_features), jnp.float32, -bound, bound)
    b = jax.random.uniform(kb, (out_features,), jnp.float32, -bound, bound)
    return w, b


def _make_params(key, C, H, D):
    ks = jax.random.split(key, 2 * C)
    w1l, b1l, w2l, b2l = [], [], [], []
    for i in range(C):
        w1_i, b1_i = _torch_linear_init(ks[2 * i], H, D)       # Linear(D -> H)
        w2_i, b2_i = _torch_linear_init(ks[2 * i + 1], 1, H)   # Linear(H -> 1)
        w1l.append(w1_i)
        b1l.append(b1_i)
        w2l.append(w2_i[0])
        b2l.append(b2_i[0])
    return (jnp.stack(w1l), jnp.stack(b1l), jnp.stack(w2l), jnp.stack(b2l))


def _reference_forward(x, w1, b1, w2, b2, active):
    """Pure-JAX mirror of the PyTorch forward (stack active outputs, sum, sigmoid)."""
    outs = []
    for c in range(w1.shape[0]):
        if active[c]:
            h = jnp.maximum(x @ w1[c].T + b1[c], 0.0)
            outs.append(h @ w2[c][:, None] + b2[c])
    return jax.nn.sigmoid(sum(outs))


if __name__ == "__main__":
    key = jax.random.PRNGKey(0)

    # Test 1: batch=8, dimension=32, small_hidden_size=16, num_components=3,
    # components 0 and 2 active (component 0 is active by default in the module).
    k1, k2, k3, k4 = jax.random.split(key, 4)
    B, D, H, C = 8, 32, 16, 3
    active = (True, False, True)
    x = jax.random.normal(k1, (B, D), jnp.float32)
    w1, b1, w2, b2 = _make_params(k2, C, H, D)

    out = plearn1hsg_forward(x, w1, b1, w2, b2, active=active)
    out = jax.block_until_ready(out)
    ref = _reference_forward(x, w1, b1, w2, b2, active)
    assert out.shape == (B, 1)
    assert jnp.allclose(out, ref, atol=1e-5, rtol=1e-5), (out, ref)

    # Test 2: unaligned shapes exercise the batch/lane padding paths.
    B2, D2, H2, C2 = 13, 40, 24, 5
    active2 = (True, False, True, False, True)
    x2 = jax.random.normal(k3, (B2, D2), jnp.float32)
    w1_2, b1_2, w2_2, b2_2 = _make_params(k4, C2, H2, D2)

    out2 = plearn1hsg_forward(x2, w1_2, b1_2, w2_2, b2_2, active=active2)
    out2 = jax.block_until_ready(out2)
    ref2 = _reference_forward(x2, w1_2, b1_2, w2_2, b2_2, active2)
    assert out2.shape == (B2, 1)
    assert jnp.allclose(out2, ref2, atol=1e-5, rtol=1e-5), (out2, ref2)

    print("KERNEL_OK")
</pallas_src>

<mosaic_0001>
module attributes {stable_mosaic.version = 11 : i64} {
  func.func @_plearn_fused_kernel(%arg0: i32, %arg1: memref<8x32xf32, #tpu.memory_space<vmem>>, %arg2: memref<32x128xf32, #tpu.memory_space<vmem>>, %arg3: memref<1x128xf32, #tpu.memory_space<vmem>>, %arg4: memref<1x128xf32, #tpu.memory_space<vmem>>, %arg5: memref<8x1xf32, #tpu.memory_space<vmem>>) attributes {dimension_semantics = [#tpu.dimension_semantics<parallel>], iteration_bounds = array<i64: 1>, scalar_prefetch = 0 : i64, scratch_operands = 0 : i64, tpu.core_type = #tpu.core_type<tc>, window_params = [{transform_indices = @transform_0, window_bounds = array<i64: 8, 32>}, {pipeline_mode = #tpu.pipeline_mode<synchronous>, transform_indices = @transform_1, window_bounds = array<i64: 32, 128>}, {pipeline_mode = #tpu.pipeline_mode<synchronous>, transform_indices = @transform_2, window_bounds = array<i64: 1, 128>}, {pipeline_mode = #tpu.pipeline_mode<synchronous>, transform_indices = @transform_3, window_bounds = array<i64: 1, 128>}, {transform_indices = @transform_4, window_bounds = array<i64: 8, 1>}]} {
    %c0 = arith.constant 0 : index
    %c0_0 = arith.constant 0 : index
    %0 = vector.load %arg1[%c0, %c0_0] : memref<8x32xf32, #tpu.memory_space<vmem>>, vector<8x32xf32>
    %c0_1 = arith.constant 0 : index
    %c0_2 = arith.constant 0 : index
    %1 = vector.load %arg2[%c0_1, %c0_2] : memref<32x128xf32, #tpu.memory_space<vmem>>, vector<32x128xf32>
    %cst = arith.constant dense<0.000000e+00> : vector<8x128xf32>
    %2 = tpu.matmul %0, %1, %cst {dimension_numbers = #tpu.dot_dimension_numbers<[1], [0], [0], [1], [0, 0, 1, 1], [], []>} : vector<8x32xf32>, vector<32x128xf32>, vector<8x128xf32> -> vector<8x128xf32>
    %c0_3 = arith.constant 0 : index
    %c0_4 = arith.constant 0 : index
    %3 = vector.load %arg3[%c0_3, %c0_4] : memref<1x128xf32, #tpu.memory_space<vmem>>, vector<1x128xf32>
    %4 = vector.broadcast %3 : vector<1x128xf32> to vector<8x128xf32>
    %5 = arith.addf %2, %4 : vector<8x128xf32>
    %cst_5 = arith.constant 0.000000e+00 : f32
    %6 = vector.broadcast %cst_5 : f32 to vector<8x128xf32>
    %7 = arith.maximumf %5, %6 : vector<8x128xf32>
    %c0_6 = arith.constant 0 : index
    %c0_7 = arith.constant 0 : index
    %8 = vector.load %arg4[%c0_6, %c0_7] : memref<1x128xf32, #tpu.memory_space<vmem>>, vector<1x128xf32>
    %9 = vector.broadcast %8 : vector<1x128xf32> to vector<8x128xf32>
    %10 = arith.mulf %7, %9 : vector<8x128xf32>
    %cst_8 = arith.constant dense<0.000000e+00> : vector<8xf32>
    %11 = vector.multi_reduction <add>, %10, %cst_8 [1] : vector<8x128xf32> to vector<8xf32>
    %12 = vector.shape_cast %11 : vector<8xf32> to vector<8x1xf32>
    %13 = arith.negf %12 : vector<8x1xf32>
    %14 = math.exp %13 : vector<8x1xf32>
    %cst_9 = arith.constant 1.000000e+00 : f32
    %15 = vector.broadcast %cst_9 : f32 to vector<8x1xf32>
    %16 = arith.addf %15, %14 : vector<8x1xf32>
    %17 = arith.divf %15, %16 : vector<8x1xf32>
    %c0_10 = arith.constant 0 : index
    %c0_11 = arith.constant 0 : index
    %18 = vector.load %arg5[%c0_10, %c0_11] : memref<8x1xf32, #tpu.memory_space<vmem>>, vector<8x1xf32>
    tpu.vector_store %arg5[%c0_10, %c0_11], %17 {strides = array<i32>} : memref<8x1xf32, #tpu.memory_space<vmem>>, vector<8x1xf32>,
    return
  }
  func.func @transform_0(%arg0: i32) -> (i32, i32) {
    %c0_i32 = arith.constant 0 : i32
    %c0_i32_0 = arith.constant 0 : i32
    return %arg0, %c0_i32 : i32, i32
  }
  func.func @transform_1(%arg0: i32) -> (i32, i32) {
    %c0_i32 = arith.constant 0 : i32
    %c0_i32_0 = arith.constant 0 : i32
    %c0_i32_1 = arith.constant 0 : i32
    return %c0_i32, %c0_i32_0 : i32, i32
  }
  func.func @transform_2(%arg0: i32) -> (i32, i32) {
    %c0_i32 = arith.constant 0 : i32
    %c0_i32_0 = arith.constant 0 : i32
    %c0_i32_1 = arith.constant 0 : i32
    return %c0_i32, %c0_i32_0 : i32, i32
  }
  func.func @transform_3(%arg0: i32) -> (i32, i32) {
    %c0_i32 = arith.constant 0 : i32
    %c0_i32_0 = arith.constant 0 : i32
    %c0_i32_1 = arith.constant 0 : i32
    return %c0_i32, %c0_i32_0 : i32, i32
  }
  func.func @transform_4(%arg0: i32) -> (i32, i32) {
    %c0_i32 = arith.constant 0 : i32
    %c0_i32_0 = arith.constant 0 : i32
    return %arg0, %c0_i32 : i32, i32
  }
}

</mosaic_0001>

<llo_original>
// kernel: plearn1hsg_forward.1
$region0: #{plearn1hsg_forward.1}
  #allocation0 [shape = 'u32[]', space=smem, size = 0x4, offset = 0x4, fixed_abs, tag = 'smem constant byte address 0x4 - core index']
  #allocation1 [shape = 'u32[144,128]{1,0:T(1,128)}', space=vmem, size = 0x12000, scoped, tag = 'internal scratch']
  %s0 = inlined_call_operand.vmem [shape: f32[8,32], index: 0, kind: input, shape index: {}]
  %s1 = inlined_call_operand.vmem [shape: f32[32,128], index: 1, kind: input, shape index: {}]
  %s2 = inlined_call_operand.vmem [shape: f32[1,128], index: 2, kind: input, shape index: {}]
  %s3 = inlined_call_operand.vmem [shape: f32[1,128], index: 3, kind: input, shape index: {}]
  %s4 = inlined_call_operand.vmem [shape: f32[8,1], index: 4, kind: output, shape index: {}]
  %s5 = sld [smem:[#allocation0]]
  $region26: #{plearn1hsg_forward.1} parent=0
    _
  %s7 = ssub.s32 1, %s5
  %s8 = scalar_select 0, %s7, %s5
  // Predicated region
  $region2: #{plearn1hsg_forward.1} parent=0 // pred_check
    _
  $region3: #{plearn1hsg_forward.1} parent=0 // pred_check_branch
    %10 = sbr.rel (0) target = $region5
  $region4: #{plearn1hsg_forward.1} parent=0 // pred_region
    _
  $region5: #{plearn1hsg_forward.1} parent=0 // pred_fallthru
    _
  // Predicated region
  $region6: #{plearn1hsg_forward.1} parent=0 // pred_check
    _
  $region7: #{plearn1hsg_forward.1} parent=0 // pred_check_branch
    %12 = sbr.rel (0) target = $region9
  $region8: #{plearn1hsg_forward.1} parent=0 // pred_region
    _
  $region9: #{plearn1hsg_forward.1} parent=0 // pred_fallthru
    _
  // Predicated region
  $region10: #{plearn1hsg_forward.1} parent=0 // pred_check
    _
  $region11: #{plearn1hsg_forward.1} parent=0 // pred_check_branch
    %14 = sbr.rel (0) target = $region13
  $region12: #{plearn1hsg_forward.1} parent=0 // pred_region
    _
  $region13: #{plearn1hsg_forward.1} parent=0 // pred_fallthru
    _
  // Predicated region
  $region14: #{plearn1hsg_forward.1} parent=0 // pred_check
    _
  $region15: #{plearn1hsg_forward.1} parent=0 // pred_check_branch
    %16 = sbr.rel (0) target = $region17
  $region16: #{plearn1hsg_forward.1} parent=0 // pred_region
    _
  $region17: #{plearn1hsg_forward.1} parent=0 // pred_fallthru
    _
  %v17 = vld [vmem:[%s0] sm:$0xff]
  %v18 = vld [vmem:[%s1] sm:$0xff]
  %v19 = vld [vmem:[%s1 + $0x8] sm:$0xff]
  %v20 = vld [vmem:[%s1 + $0x10] sm:$0xff]
  %v21 = vld [vmem:[%s1 + $0x18] sm:$0xff]
  %v22 = vld [vmem:[%s2] sm:$0x1]
  %v24 = vlaneseq
  %v25 = vshrl.u32 %v24, 7
  %v26 = vsub.s32 0, %v25
  %v27 = vrot.slane %v22, %v26
  %vm29 = vcmask 261120
  %v31 = vsel %vm29, %v17, 0
  %33 = vmatprep.subr.mxu0 0.0
  %34 = vmatpush1.msra.mxu0 0.0
  %35 = vmatprep.subr.mxu0 0.0
  %36 = vmatpush1.msra.mxu0 0.0
  %37 = vmatprep.subr.mxu0 0.0
  %38 = vmatpush1.msra.mxu0 0.0
  %39 = vmatprep.subr.mxu0 0.0
  %40 = vmatpush1.msra.mxu0 0.0
  %41 = vmatprep.subr.mxu0 0.0
  %42 = vmatpush1.msra.mxu0 0.0
  %43 = vmatprep.subr.mxu0 0.0
  %44 = vmatpush1.msra.mxu0 0.0
  %45 = vmatprep.subr.mxu0 0.0
  %46 = vmatpush1.msra.mxu0 0.0
  %47 = vmatprep.subr.mxu0 0.0
  %48 = vmatpush1.msra.mxu0 0.0
  %49 = vmatprep.subr.mxu0 0.0
  %50 = vmatpush1.msra.mxu0 0.0
  %51 = vmatprep.subr.mxu0 0.0
  %52 = vmatpush1.msra.mxu0 0.0
  %53 = vmatprep.subr.mxu0 0.0
  %54 = vmatpush1.msra.mxu0 0.0
  %55 = vmatprep.subr.mxu0 0.0
  %56 = vmatpush1.msra.mxu0 0.0
  %57 = vmatprep.subr.mxu0 0.0
  %58 = vmatpush1.msra.mxu0 %v21
  %59 = vmatprep.subr.mxu0 0.0
  %60 = vmatpush1.msra.mxu0 %v20
  %61 = vmatprep.subr.mxu0 0.0
  %62 = vmatpush1.msra.mxu0 %v19
  %63 = vmatprep.subr.mxu0 0.0
  %64 = vmatpush1.msra.mxu0 %v18
  %65 = vmatprep.subr.mxu0 0.0
  %66 = vmatpush2.msra.mxu0 0.0
  %67 = vmatprep.subr.mxu0 0.0
  %68 = vmatpush2.msra.mxu0 0.0
  %69 = vmatprep.subr.mxu0 0.0
  %70 = vmatpush2.msra.mxu0 0.0
  %71 = vmatprep.subr.mxu0 0.0
  %72 = vmatpush2.msra.mxu0 0.0
  %73 = vmatprep.subr.mxu0 0.0
  %74 = vmatpush2.msra.mxu0 0.0
  %75 = vmatprep.subr.mxu0 0.0
  %76 = vmatpush2.msra.mxu0 0.0
  %77 = vmatprep.subr.mxu0 0.0
  %78 = vmatpush2.msra.mxu0 0.0
  %79 = vmatprep.subr.mxu0 0.0
  %80 = vmatpush2.msra.mxu0 0.0
  %81 = vmatprep.subr.mxu0 0.0
  %82 = vmatpush2.msra.mxu0 0.0
  %83 = vmatprep.subr.mxu0 0.0
  %84 = vmatpush2.msra.mxu0 0.0
  %85 = vmatprep.subr.mxu0 0.0
  %86 = vmatpush2.msra.mxu0 0.0
  %87 = vmatprep.subr.mxu0 0.0
  %88 = vmatpush2.msra.mxu0 0.0
  %89 = vmatprep.subr.mxu0 0.0
  %90 = vmatpush2.msra.mxu0 0.0
  %91 = vmatprep.subr.mxu0 0.0
  %92 = vmatpush2.msra.mxu0 0.0
  %93 = vmatprep.subr.mxu0 0.0
  %94 = vmatpush2.msra.mxu0 0.0
  %95 = vmatprep.subr.mxu0 0.0
  %96 = vmatpush2.msra.mxu0 0.0
  %97 = vmatprep.mubr.f32.mxu0 0.0
  %98 = vmatmul.mubr.f32.gmra.mxu0 %v31
  %v99 = vpop.f32.mrf.mxu0
  %v100 = vadd.f32 %v27, %v99
  %v101 = vpop.f32.mrf.mxu0
  %102 = vdwg.mxu0
  %v103 = vmax.f32 %v100, 0.0
  %v104 = vld [vmem:[%s3] sm:$0x1]
  %v106 = vlaneseq
  %v107 = vshrl.u32 %v106, 7
  %v108 = vsub.s32 0, %v107
  %v109 = vrot.slane %v104, %v108
  %v111 = vmul.f32 %v103, %v109
  %112 = vadd.xlane.f32.xlu0 %v111
  %v113 = vpop.xlane.xlu0 %112
  %v114 = vxor.u32 %v113, 2147483648
  %v115 = vmul.f32 %v114, 1.442695
  %v116 = vpow.pop %v115
  %v117 = vadd.f32 %v116, 1.0
  %v118 = vrcp.pop %v117
  %v119 = vmul.f32 1.0, %v118
  %vm120 = vcmask 7168
  %121 = vst.msk [vmem:[%s4] sm:$0xff] %vm120, %v119
  // Predicated region
  $region18: #{plearn1hsg_forward.1} parent=0 // pred_check
    _
  $region19: #{plearn1hsg_forward.1} parent=0 // pred_check_branch
    %123 = sbr.rel (0) target = $region21
  $region20: #{plearn1hsg_forward.1} parent=0 // pred_region
    _
  $region21: #{plearn1hsg_forward.1} parent=0 // pred_fallthru
    _
  // Predicated region
  $region22: #{plearn1hsg_forward.1} parent=0 // pred_check
    _
  $region23: #{plearn1hsg_forward.1} parent=0 // pred_check_branch
    %125 = sbr.rel (0) target = $region25
  $region24: #{plearn1hsg_forward.1} parent=0 // pred_region
    _
  $region25: #{plearn1hsg_forward.1} parent=0 // pred_fallthru
    _

</llo_original>
